<compile_context>
chip_gen: v5e
topology: v5e:2x2
jax: 0.10.0
libtpu: 0.0.40
codegen_flags: <defaults>
</compile_context>

<pallas_src>
import jax
import jax.numpy as jnp
import numpy as np
from jax.experimental import pallas as pl
from jax.experimental.pallas import tpu as pltpu


# ----------------------------- Pallas kernels -------------------------------
def _im2col_gemm_kernel(cols_ref, w_ref, o_ref):
    # cols_ref: (TILE_N, KC_PAD)     bf16  gathered neighbor features (im2col)
    # w_ref   : (KC_PAD, C_OUT_PAD)  bf16  folded, depth+lane padded weights
    # o_ref   : (TILE_N, C_OUT_PAD)  bf16  lane-dense output tile
    o_ref[...] = jnp.dot(
        cols_ref[...], w_ref[...], preferred_element_type=jnp.float32
    ).astype(o_ref.dtype)


def _im2col_gemm_bias_kernel(cols_ref, w_ref, b_ref, o_ref):
    # Same GEMM, with the bias folded into the fp32 epilogue (saves a separate
    # XLA pass over the (N, C_out) output in HBM).
    acc = jnp.dot(cols_ref[...], w_ref[...], preferred_element_type=jnp.float32)
    o_ref[...] = (acc + b_ref[...]).astype(o_ref.dtype)


def _choose_tile_n(n):
    # Big tiles amortize the ~0.35us per-grid-step overhead and make the cols
    # DMAs large/contiguous.  Target >= 4 grid steps (>= 2 per v7x TensorCore),
    # then cap at 2048: per-step VMEM at the cap is ~5 MiB, far under the
    # 32 MiB scoped limit on every generation (v5e/v6e could go to 4096).
    t = pl.cdiv(pl.cdiv(n, 4), 128) * 128
    return int(max(128, min(2048, t)))


def sparse_subm_conv3d(features, indices, weight, bias=None, *, tile_n=None):
    """features (N, C_in), indices (N, K^3) int32 (-1 = no neighbor),
    weight (K^3, C_in, C_out) -> (N, C_out) bf16."""
    n, c_in = features.shape
    k_volume, _, c_out = weight.shape
    kc = k_volume * c_in

    if tile_n is None:
        tile_n = _choose_tile_n(n)
    n_pad = pl.cdiv(n, tile_n) * tile_n
    kc_pad = pl.cdiv(kc, 128) * 128        # 432 -> 512: unmasked vld, clean MXU
    c_out_pad = pl.cdiv(c_out, 128) * 128  # lane-dense output stores

    # --- im2col gather (plain JAX / XLA): a real gather instead of a one-hot
    # matmul.  take -> where -> reshape -> pad is one fused producer, so the
    # 27x-expanded slab is written to HBM exactly once and read once by the
    # kernel's input DMAs.
    # TODO(synk): see header — move this gather into the Pallas pipeline.
    valid = indices >= 0
    safe = jnp.where(valid, indices, 0)
    cols = jnp.take(features.astype(jnp.bfloat16), safe, axis=0)   # (N, K^3, C_in)
    cols = jnp.where(valid[..., None], cols, 0).reshape(n, kc)
    cols = jnp.pad(cols, ((0, n_pad - n), (0, kc_pad - kc)))

    # Fold K^3 into the contraction depth; zero-pad depth to 512 and C_out to
    # 128 (padded rows/lanes contribute exactly zero to the GEMM).
    w2d = weight.reshape(kc, c_out).astype(jnp.bfloat16)
    w2d = jnp.pad(w2d, ((0, kc_pad - kc), (0, c_out_pad - c_out)))

    in_specs = [
        pl.BlockSpec((tile_n, kc_pad), lambda i: (i, 0)),       # im2col tile
        # Constant index_map -> the folded weights are fetched once and stay
        # VMEM-resident across the whole (parallel) grid.
        pl.BlockSpec((kc_pad, c_out_pad), lambda i: (0, 0)),
    ]
    operands = [cols, w2d]
    if bias is not None:
        b2d = jnp.pad(bias.astype(jnp.float32).reshape(1, c_out),
                      ((0, 0), (0, c_out_pad - c_out)))
        in_specs.append(pl.BlockSpec((1, c_out_pad), lambda i: (0, 0)))
        operands.append(b2d)
        kernel = _im2col_gemm_bias_kernel
    else:
        kernel = _im2col_gemm_kernel

    cost = pl.CostEstimate(
        flops=2 * n_pad * kc_pad * c_out_pad,
        transcendentals=0,
        bytes_accessed=(n_pad * kc_pad + kc_pad * c_out_pad
                        + n_pad * c_out_pad) * 2,
    )

    out = pl.pallas_call(
        kernel,
        out_shape=jax.ShapeDtypeStruct((n_pad, c_out_pad), jnp.bfloat16),
        grid=(n_pad // tile_n,),
        in_specs=in_specs,
        out_specs=pl.BlockSpec((tile_n, c_out_pad), lambda i: (i, 0)),
        compiler_params=pltpu.CompilerParams(
            dimension_semantics=("parallel",),
            vmem_limit_bytes=32 * 1024 * 1024,
        ),
        cost_estimate=cost,
    )(*operands)

    # The module contract is a dense (N, C_out) feature tensor, so the 128-lane
    # padding is sliced off here; a consumer that accepts lane-padded features
    # could skip this relayout and slice rows only.
    return out[:n, :c_out]


# --------------------------- glue (plain JAX) --------------------------------
# TODO(synk): gen_conv3d_subm_indices (hash-table rulebook build) has no clean
# Pallas hot path; it is index bookkeeping, done here with a dense LUT in JAX.
def gen_conv3d_subm_indices(coords, spatial_range, kernel_size):
    B, X, Y, Z = spatial_range
    n = coords.shape[0]
    lin = coords[:, 3] + Z * (coords[:, 2] + Y * (coords[:, 1] + X * coords[:, 0]))
    lut = jnp.full((B * X * Y * Z,), -1, jnp.int32).at[lin].set(
        jnp.arange(n, dtype=jnp.int32))

    r = kernel_size // 2
    offs = jnp.array([(dx, dy, dz)
                      for dx in range(-r, r + 1)
                      for dy in range(-r, r + 1)
                      for dz in range(-r, r + 1)], dtype=jnp.int32)   # (K^3, 3)

    nb = coords[:, None, 1:4] + offs[None, :, :]                      # (N, K^3, 3)
    b = coords[:, 0][:, None]
    in_bounds = ((nb[..., 0] >= 0) & (nb[..., 0] < X) &
                 (nb[..., 1] >= 0) & (nb[..., 1] < Y) &
                 (nb[..., 2] >= 0) & (nb[..., 2] < Z))
    nlin = nb[..., 2] + Z * (nb[..., 1] + Y * (nb[..., 0] + X * b))
    nlin = jnp.where(in_bounds, nlin, 0)
    return jnp.where(in_bounds, lut[nlin], -1).astype(jnp.int32)      # (N, K^3)


def reference_subm_conv3d(features, indices, weight):
    valid = indices >= 0
    safe = jnp.where(valid, indices, 0)
    g = features[safe]                                                # (N, K^3, C_in)
    g = jnp.where(valid[..., None], g, 0).astype(jnp.float32)
    return jnp.einsum('nkc,kco->no', g, weight.astype(jnp.float32))


# --------------------------------- main --------------------------------------
if __name__ == "__main__":
    key = jax.random.PRNGKey(0)
    k_vox, k_feat, k_w = jax.random.split(key, 3)

    in_channels, out_channels, kernel_size = 16, 32, 3
    k_volume = kernel_size ** 3
    spatial_range = [2, 8, 8, 8]   # (batch, X, Y, Z)
    B, X, Y, Z = spatial_range
    n_points = 200

    # Unique active voxels -> coords (N, 4) int32  [batch, x, y, z]
    vox = jax.random.choice(k_vox, B * X * Y * Z, shape=(n_points,),
                            replace=False).astype(jnp.int32)
    bb = vox // (X * Y * Z)
    rem = vox % (X * Y * Z)
    xx = rem // (Y * Z)
    rem = rem % (Y * Z)
    yy = rem // Z
    zz = rem % Z
    coords = jnp.stack([bb, xx, yy, zz], axis=1).astype(jnp.int32)

    # Deterministic parameters / inputs (half in torch -> bf16 here)
    features = jax.random.normal(k_feat, (n_points, in_channels),
                                 dtype=jnp.float32).astype(jnp.bfloat16)
    fan_in = k_volume * in_channels
    weight = (jax.random.normal(k_w, (k_volume, in_channels, out_channels),
                                dtype=jnp.float32) / jnp.sqrt(fan_in)
              ).astype(jnp.bfloat16)
    bias = None  # module default: bias=False

    indices = gen_conv3d_subm_indices(coords, spatial_range, kernel_size)

    out = sparse_subm_conv3d(features, indices, weight, bias)
    out = jax.block_until_ready(out)

    ref = reference_subm_conv3d(features, indices, weight)
    np.testing.assert_allclose(np.asarray(out, np.float32), np.asarray(ref),
                               rtol=5e-2, atol=2e-2)

    assert out.shape == (n_points, out_channels)
    print("KERNEL_OK")
</pallas_src>

<mosaic_0001>
module attributes {stable_mosaic.version = 11 : i64} {
  func.func @_im2col_gemm_kernel(%arg0: i32, %arg1: memref<128x512xbf16, #tpu.memory_space<vmem>>, %arg2: memref<512x128xbf16, #tpu.memory_space<vmem>>, %arg3: memref<128x128xbf16, #tpu.memory_space<vmem>>) attributes {dimension_semantics = [#tpu.dimension_semantics<parallel>], iteration_bounds = array<i64: 2>, scalar_prefetch = 0 : i64, scratch_operands = 0 : i64, tpu.core_type = #tpu.core_type<tc>, window_params = [{transform_indices = @transform_0, window_bounds = array<i64: 128, 512>}, {pipeline_mode = #tpu.pipeline_mode<synchronous>, transform_indices = @transform_1, window_bounds = array<i64: 512, 128>}, {transform_indices = @transform_2, window_bounds = array<i64: 128, 128>}]} {
    %c0 = arith.constant 0 : index
    %c0_0 = arith.constant 0 : index
    %0 = vector.load %arg1[%c0, %c0_0] : memref<128x512xbf16, #tpu.memory_space<vmem>>, vector<128x512xbf16>
    %c0_1 = arith.constant 0 : index
    %c0_2 = arith.constant 0 : index
    %1 = vector.load %arg2[%c0_1, %c0_2] : memref<512x128xbf16, #tpu.memory_space<vmem>>, vector<512x128xbf16>
    %cst = arith.constant dense<0.000000e+00> : vector<128x128xf32>
    %2 = tpu.matmul %0, %1, %cst {dimension_numbers = #tpu.dot_dimension_numbers<[1], [0], [0], [1], [0, 0, 1, 1], [], []>} : vector<128x512xbf16>, vector<512x128xbf16>, vector<128x128xf32> -> vector<128x128xf32>
    %3 = arith.truncf %2 : vector<128x128xf32> to vector<128x128xbf16>
    %c0_3 = arith.constant 0 : index
    %c0_4 = arith.constant 0 : index
    %4 = vector.load %arg3[%c0_3, %c0_4] : memref<128x128xbf16, #tpu.memory_space<vmem>>, vector<128x128xbf16>
    tpu.vector_store %arg3[%c0_3, %c0_4], %3 {strides = array<i32>} : memref<128x128xbf16, #tpu.memory_space<vmem>>, vector<128x128xbf16>,
    return
  }
  func.func @transform_0(%arg0: i32) -> (i32, i32) {
    %c0_i32 = arith.constant 0 : i32
    %c0_i32_0 = arith.constant 0 : i32
    return %arg0, %c0_i32 : i32, i32
  }
  func.func @transform_1(%arg0: i32) -> (i32, i32) {
    %c0_i32 = arith.constant 0 : i32
    %c0_i32_0 = arith.constant 0 : i32
    %c0_i32_1 = arith.constant 0 : i32
    return %c0_i32, %c0_i32_0 : i32, i32
  }
  func.func @transform_2(%arg0: i32) -> (i32, i32) {
    %c0_i32 = arith.constant 0 : i32
    %c0_i32_0 = arith.constant 0 : i32
    return %arg0, %c0_i32 : i32, i32
  }
}

</mosaic_0001>

<llo_original>
// kernel: tpu_custom_call.1
$region0: #{tpu_custom_call.1}
  #allocation0 [shape = 'u32[]', space=smem, size = 0x4, offset = 0x4, fixed_abs, tag = 'smem constant byte address 0x4 - core index']
  #allocation1 [shape = 'u32[72,128]{1,0:T(1,128)}', space=vmem, size = 0x9000, scoped, tag = 'internal scratch']
  %s0 = inlined_call_operand.hbm [shape: bf16[256,512], index: 0, kind: input, shape index: {}]
  %s1 = inlined_call_operand.hbm [shape: bf16[512,128], index: 1, kind: input, shape index: {}]
  %s2 = inlined_call_operand.hbm [shape: bf16[256,128], index: 2, kind: output, shape index: {}]
  %s3 = sld [smem:[#allocation0]]
  $region49: #{tpu_custom_call.1} parent=0
    _
  %s5 = ssub.s32 1, %s3
  %s6 = scalar_select 0, %s5, %s3
  $region1: #{tpu_custom_call.1} parent=0
    #allocation2 [shape = 'u8[262144]{0}', space=vmem, size = 0x40000, scoped, tag = 'input window, operand 0']
    #allocation3 [shape = 's32[2]{0}', space=sflag, size = 0x8, scoped, tag = 'scoped memory for tpu_custom_call.1']
    #allocation4 [shape = 's32[2]{0}', space=sflag, size = 0x8, scoped, tag = 'scoped memory for tpu_custom_call.1']
    #allocation5 [shape = 'u8[131072]{0}', space=vmem, size = 0x20000, scoped, tag = 'input window, operand 1, single buffered']
    #allocation6 [shape = 's32[1]{0}', space=sflag, size = 0x4, scoped, tag = 'scoped memory for tpu_custom_call.1']
    #allocation7 [shape = 'u8[65536]{0}', space=vmem, size = 0x10000, scoped, tag = 'output window, operand 0']
    %7 = vsyncpa [#allocation3], 0
    %s8 = scalar_lea.sflag [#allocation3], 1
    %9 = vsyncpa %s8, 0
    %10 = vsyncpa [#allocation6], 0
    %11 = vsyncpa [#allocation4], 0
    %s12 = scalar_lea.sflag [#allocation4], 1
    %13 = vsyncpa %s12, 0
    loop: start=0, step=1, limit=4
    $region2: #{tpu_custom_call.1} parent=1 // loop_pre_header
      _
    $region3: #{tpu_custom_call.1} parent=1 // loop_header
      %s15 = sphi 0, %s19
      %p16 = scmp.ge.s32.totalorder %s15, 4
      %s25 = sphi 0, %s27
      %s28 = sphi 0, %s25
      %s29 = sphi 0, %s28
      %s45 = sphi 0, %s29
      %s49 = sphi 0, %s49
      %s51 = sphi 0, %s49
      %s52 = sphi 0, %s51
      %s66 = sphi 0, %s52
      %s72 = sphi 0, %s74
      %s75 = sphi 0, %s72
      %s76 = sphi 0, %s75
      %s92 = sphi 0, %s76
    $region4: #{tpu_custom_call.1} parent=1 // loop_header_branch
      %18 = sbr.rel (%p16) target = $region8
    $region5: #{tpu_custom_call.1} parent=1 // loop_body
      %s20 = ssub.s32 %s15, 1
      %s21 = ssub.s32 %s15, 2
      %s22 = sadd.s32 %s15, 1
      %s23 = ssub.s32 %s15, %s22
      %p24 = scmp.eq.s32.totalorder %s23, 0
      %s26 = sadd.s32 %s25, 1
      %s27 = scalar_select %p24, %s25, %s26
      %p30 = pneg %p24
      %p31 = scmp.eq.s32.totalorder %s15, 1
      %p32 = por %p30, %p31
      %p33 = scmp.ne.s32.totalorder %s25, %s28
      %p34 = scmp.eq.s32.totalorder %s15, 0
      %p35 = por %p33, %p34
      %p36 = scmp.ne.s32.totalorder %s25, %s28
      %p37 = scmp.eq.s32.totalorder %s20, 1
      %p38 = por %p36, %p37
      %p39 = scmp.ne.s32.totalorder %s28, %s29
      %p40 = scmp.eq.s32.totalorder %s20, 0
      %p41 = por %p39, %p40
      %p42 = scmp.ne.s32.totalorder %s28, %s29
      %p43 = scmp.eq.s32.totalorder %s21, 1
      %p44 = por %p42, %p43
      %p46 = scmp.ne.s32.totalorder %s29, %s45
      %p47 = scmp.eq.s32.totalorder %s21, 0
      %p48 = por %p46, %p47
      %s50 = sadd.s32 %s49, 1
      %p53 = scmp.eq.s32.totalorder %s15, 1
      %p54 = scmp.ne.s32.totalorder %s49, %s51
      %p55 = scmp.eq.s32.totalorder %s15, 0
      %p56 = por %p54, %p55
      %p57 = scmp.ne.s32.totalorder %s49, %s51
      %p58 = scmp.eq.s32.totalorder %s20, 1
      %p59 = por %p57, %p58
      %p60 = scmp.ne.s32.totalorder %s51, %s52
      %p61 = scmp.eq.s32.totalorder %s20, 0
      %p62 = por %p60, %p61
      %p63 = scmp.ne.s32.totalorder %s51, %s52
      %p64 = scmp.eq.s32.totalorder %s21, 1
      %p65 = por %p63, %p64
      %p67 = scmp.ne.s32.totalorder %s52, %s66
      %p68 = scmp.eq.s32.totalorder %s21, 0
      %p69 = por %p67, %p68
      %s70 = ssub.s32 %s15, %s22
      %p71 = scmp.eq.s32.totalorder %s70, 0
      %s73 = sadd.s32 %s72, 1
      %s74 = scalar_select %p71, %s72, %s73
      %p77 = pneg %p71
      %p78 = scmp.eq.s32.totalorder %s15, 1
      %p79 = por %p77, %p78
      %p80 = scmp.ne.s32.totalorder %s72, %s75
      %p81 = scmp.eq.s32.totalorder %s15, 0
      %p82 = por %p80, %p81
      %p83 = scmp.ne.s32.totalorder %s72, %s75
      %p84 = scmp.eq.s32.totalorder %s20, 1
      %p85 = por %p83, %p84
      %p86 = scmp.ne.s32.totalorder %s75, %s76
      %p87 = scmp.eq.s32.totalorder %s20, 0
      %p88 = por %p86, %p87
      %p89 = scmp.ne.s32.totalorder %s75, %s76
      %p90 = scmp.eq.s32.totalorder %s21, 1
      %p91 = por %p89, %p90
      %p93 = scmp.ne.s32.totalorder %s76, %s92
      %p94 = scmp.eq.s32.totalorder %s21, 0
      %p95 = por %p93, %p94
      %p96 = scmp.le.s32.totalorder 1, %s15
      %p97 = scmp.lt.s32.totalorder %s15, 3
      %p98 = pnand %p96, %p97
      %p99 = pneg %p98
      // Predicated region
      $region9: #{tpu_custom_call.1} parent=5 // pred_check
        _
      $region10: #{tpu_custom_call.1} parent=5 // pred_check_branch
        %101 = sbr.rel (%p98) target = $region12
      $region11: #{tpu_custom_call.1} parent=5 // pred_region
        %s102 = ssub.s32 %s15, 1
        // Predicated region
        $region13: #{tpu_custom_call.1} parent=11 // pred_check
          %p103 = pneg %p62
        $region14: #{tpu_custom_call.1} parent=11 // pred_check_branch
          %105 = sbr.rel (%p103) target = $region16
        $region15: #{tpu_custom_call.1} parent=11 // pred_region
          %107 = vsyncadd [#allocation6], 0
          %s108 = sshll.u32 %s1, 4
          %s109 = int_to_ptr.hbm [resolvable:$true] %s108
          %s110 = sshll.u32 [#allocation5], 4
          %s111 = int_to_ptr.vmem [resolvable:$true] %s110
          %116 = dma.hbm_to_vmem [thread:$0]  %s109, 4096, %s111, [#allocation6], 64, 64, 4
        $region16: #{tpu_custom_call.1} parent=11 // pred_fallthru
          _
      $region12: #{tpu_custom_call.1} parent=5 // pred_fallthru
        _
      %p117 = scmp.lt.s32.totalorder %s15, 2
      // Predicated region
      $region17: #{tpu_custom_call.1} parent=5 // pred_check
        %p118 = pneg %p117
      $region18: #{tpu_custom_call.1} parent=5 // pred_check_branch
        %120 = sbr.rel (%p118) target = $region20
      $region19: #{tpu_custom_call.1} parent=5 // pred_region
        // Predicated region
        $region21: #{tpu_custom_call.1} parent=19 // pred_check
          %p121 = pneg %p35
        $region22: #{tpu_custom_call.1} parent=19 // pred_check_branch
          %123 = sbr.rel (%p121) target = $region24
        $region23: #{tpu_custom_call.1} parent=19 // pred_region
          %s124 = sand.u32 %s25, 1
          %s125 = scalar_lea.sflag [#allocation3], %s124
          %s126 = sand.u32 %s25, 1
          %s127 = smul.addr %s126, 256
          %s128 = scalar_lea.vmem [#allocation2], %s127
          %s129 = smul.u32 16, %s15
          %131 = vsyncadd %s125, 0
          %s132 = smul.addr %s129, 4
          %s133 = smul.addr %s132, 4
          %s134 = scalar_lea.hbm %s0, %s133
          %s135 = sshll.u32 %s134, 4
          %s136 = int_to_ptr.hbm [resolvable:$true] %s135
          %s137 = sshll.u32 %s128, 4
          %s138 = int_to_ptr.vmem [resolvable:$true] %s137
          %143 = dma.hbm_to_vmem [thread:$0]  %s136, 4096, %s138, %s125, 256, 256, 16
        $region24: #{tpu_custom_call.1} parent=19 // pred_fallthru
          _
      $region20: #{tpu_custom_call.1} parent=5 // pred_fallthru
        _
      %p144 = scmp.le.s32.totalorder 1, %s15
      %p145 = scmp.lt.s32.totalorder %s15, 3
      %p146 = pnand %p144, %p145
      %p147 = pneg %p146
      // Predicated region
      $region25: #{tpu_custom_call.1} parent=5 // pred_check
        _
      $region26: #{tpu_custom_call.1} parent=5 // pred_check_branch
        %149 = sbr.rel (%p146) target = $region28
      $region27: #{tpu_custom_call.1} parent=5 // pred_region
        %s150 = ssub.s32 %s15, 1
        %s151 = sand.u32 %s28, 1
        %s152 = scalar_lea.sflag [#allocation3], %s151
        %s153 = sand.u32 %s28, 1
        %s154 = smul.addr %s153, 256
        %s155 = scalar_lea.vmem [#allocation2], %s154
        // Predicated region
        $region29: #{tpu_custom_call.1} parent=27 // pred_check
          %p156 = pneg %p41
        $region30: #{tpu_custom_call.1} parent=27 // pred_check_branch
          %158 = sbr.rel (%p156) target = $region32
        $region31: #{tpu_custom_call.1} parent=27 // pred_region
          %160 = dma.done %s152, 4096
        $region32: #{tpu_custom_call.1} parent=27 // pred_fallthru
          _
        // Predicated region
        $region33: #{tpu_custom_call.1} parent=27 // pred_check
          %p161 = pneg %p62
        $region34: #{tpu_custom_call.1} parent=27 // pred_check_branch
          %163 = sbr.rel (%p161) target = $region36
        $region35: #{tpu_custom_call.1} parent=27 // pred_region
          %165 = dma.done [#allocation6], 4096
        $region36: #{tpu_custom_call.1} parent=27 // pred_fallthru
          _
        %s166 = sand.u32 %s28, 1
        %s167 = scalar_lea.sflag [#allocation3], %s166
        %s168 = sand.u32 %s28, 1
        %s169 = smul.addr %s168, 256
        %s170 = scalar_lea.vmem [#allocation2], %s169
        %p171 = pneg %p41
        %p172 = pneg %p38
        %p173 = pneg %p62
        %p174 = pneg %p59
        %p175 = pneg %p88
        %p176 = pneg %p85
        %s177 = sand.u32 %s75, 1
        %s178 = scalar_lea.sflag [#allocation4], %s177
        %s179 = sand.u32 %s75, 1
        %s180 = smul.addr %s179, 64
        %s181 = scalar_lea.vmem [#allocation7], %s180
        %s182 = smul.u32 16, %s20
        %s183 = smul.u32 16, %s20
        %v184 = vld [vmem:[%s155] sm:$0xff]
        %v185 = vld [vmem:[%s155 + $0x8] sm:$0xff]
        %v186 = vld [vmem:[%s155 + $0x10] sm:$0xff]
        %v187 = vld [vmem:[%s155 + $0x18] sm:$0xff]
        %v188 = vld [vmem:[%s155 + $0x20] sm:$0xff]
        %v189 = vld [vmem:[%s155 + $0x28] sm:$0xff]
        %v190 = vld [vmem:[%s155 + $0x30] sm:$0xff]
        %v191 = vld [vmem:[%s155 + $0x38] sm:$0xff]
        %v192 = vld [vmem:[%s155 + $0x40] sm:$0xff]
        %v193 = vld [vmem:[%s155 + $0x48] sm:$0xff]
        %v194 = vld [vmem:[%s155 + $0x50] sm:$0xff]
        %v195 = vld [vmem:[%s155 + $0x58] sm:$0xff]
        %v196 = vld [vmem:[%s155 + $0x60] sm:$0xff]
        %v197 = vld [vmem:[%s155 + $0x68] sm:$0xff]
        %v198 = vld [vmem:[%s155 + $0x70] sm:$0xff]
        %v199 = vld [vmem:[%s155 + $0x78] sm:$0xff]
        %v200 = vld [vmem:[%s155 + $0x80] sm:$0xff]
        %v201 = vld [vmem:[%s155 + $0x88] sm:$0xff]
        %v202 = vld [vmem:[%s155 + $0x90] sm:$0xff]
        %v203 = vld [vmem:[%s155 + $0x98] sm:$0xff]
        %v204 = vld [vmem:[%s155 + $0xa0] sm:$0xff]
        %v205 = vld [vmem:[%s155 + $0xa8] sm:$0xff]
        %v206 = vld [vmem:[%s155 + $0xb0] sm:$0xff]
        %v207 = vld [vmem:[%s155 + $0xb8] sm:$0xff]
        %v208 = vld [vmem:[%s155 + $0xc0] sm:$0xff]
        %v209 = vld [vmem:[%s155 + $0xc8] sm:$0xff]
        %v210 = vld [vmem:[%s155 + $0xd0] sm:$0xff]
        %v211 = vld [vmem:[%s155 + $0xd8] sm:$0xff]
        %v212 = vld [vmem:[%s155 + $0xe0] sm:$0xff]
        %v213 = vld [vmem:[%s155 + $0xe8] sm:$0xff]
        %v214 = vld [vmem:[%s155 + $0xf0] sm:$0xff]
        %v215 = vld [vmem:[%s155 + $0xf8] sm:$0xff]
        %v216 = vld [vmem:[#allocation5] sm:$0xf]
        %v217 = vld [vmem:[#allocation5 + $0x4] sm:$0xf]
        %v218 = vld [vmem:[#allocation5 + $0x8] sm:$0xf]
        %v219 = vld [vmem:[#allocation5 + $0xc] sm:$0xf]
        %v220 = vld [vmem:[#allocation5 + $0x10] sm:$0xf]
        %v221 = vld [vmem:[#allocation5 + $0x14] sm:$0xf]
        %v222 = vld [vmem:[#allocation5 + $0x18] sm:$0xf]
        %v223 = vld [vmem:[#allocation5 + $0x1c] sm:$0xf]
        %v224 = vld [vmem:[#allocation5 + $0x20] sm:$0xf]
        %v225 = vld [vmem:[#allocation5 + $0x24] sm:$0xf]
        %v226 = vld [vmem:[#allocation5 + $0x28] sm:$0xf]
        %v227 = vld [vmem:[#allocation5 + $0x2c] sm:$0xf]
        %v228 = vld [vmem:[#allocation5 + $0x30] sm:$0xf]
        %v229 = vld [vmem:[#allocation5 + $0x34] sm:$0xf]
        %v230 = vld [vmem:[#allocation5 + $0x38] sm:$0xf]
        %v231 = vld [vmem:[#allocation5 + $0x3c] sm:$0xf]
        %v232 = vld [vmem:[#allocation5 + $0x40] sm:$0xf]
        %v233 = vld [vmem:[#allocation5 + $0x44] sm:$0xf]
        %v234 = vld [vmem:[#allocation5 + $0x48] sm:$0xf]
        %v235 = vld [vmem:[#allocation5 + $0x4c] sm:$0xf]
        %v236 = vld [vmem:[#allocation5 + $0x50] sm:$0xf]
        %v237 = vld [vmem:[#allocation5 + $0x54] sm:$0xf]
        %v238 = vld [vmem:[#allocation5 + $0x58] sm:$0xf]
        %v239 = vld [vmem:[#allocation5 + $0x5c] sm:$0xf]
        %v240 = vld [vmem:[#allocation5 + $0x60] sm:$0xf]
        %v241 = vld [vmem:[#allocation5 + $0x64] sm:$0xf]
        %v242 = vld [vmem:[#allocation5 + $0x68] sm:$0xf]
        %v243 = vld [vmem:[#allocation5 + $0x6c] sm:$0xf]
        %v244 = vld [vmem:[#allocation5 + $0x70] sm:$0xf]
        %v245 = vld [vmem:[#allocation5 + $0x74] sm:$0xf]
        %v246 = vld [vmem:[#allocation5 + $0x78] sm:$0xf]
        %v247 = vld [vmem:[#allocation5 + $0x7c] sm:$0xf]
        %v248 = vld [vmem:[#allocation5 + $0x80] sm:$0xf]
        %v249 = vld [vmem:[#allocation5 + $0x84] sm:$0xf]
        %v250 = vld [vmem:[#allocation5 + $0x88] sm:$0xf]
        %v251 = vld [vmem:[#allocation5 + $0x8c] sm:$0xf]
        %v252 = vld [vmem:[#allocation5 + $0x90] sm:$0xf]
        %v253 = vld [vmem:[#allocation5 + $0x94] sm:$0xf]
        %v254 = vld [vmem:[#allocation5 + $0x98] sm:$0xf]
        %v255 = vld [vmem:[#allocation5 + $0x9c] sm:$0xf]
        %v256 = vld [vmem:[#allocation5 + $0xa0] sm:$0xf]
        %v257 = vld [vmem:[#allocation5 + $0xa4] sm:$0xf]
        %v258 = vld [vmem:[#allocation5 + $0xa8] sm:$0xf]
        %v259 = vld [vmem:[#allocation5 + $0xac] sm:$0xf]
        %v260 = vld [vmem:[#allocation5 + $0xb0] sm:$0xf]
        %v261 = vld [vmem:[#allocation5 + $0xb4] sm:$0xf]
        %v262 = vld [vmem:[#allocation5 + $0xb8] sm:$0xf]
        %v263 = vld [vmem:[#allocation5 + $0xbc] sm:$0xf]
        %v264 = vld [vmem:[#allocation5 + $0xc0] sm:$0xf]
        %v265 = vld [vmem:[#allocation5 + $0xc4] sm:$0xf]
        %v266 = vld [vmem:[#allocation5 + $0xc8] sm:$0xf]
        %v267 = vld [vmem:[#allocation5 + $0xcc] sm:$0xf]
        %v268 = vld [vmem:[#allocation5 + $0xd0] sm:$0xf]
        %v269 = vld [vmem:[#allocation5 + $0xd4] sm:$0xf]
        %v270 = vld [vmem:[#allocation5 + $0xd8] sm:$0xf]
        %v271 = vld [vmem:[#allocation5 + $0xdc] sm:$0xf]
        %v272 = vld [vmem:[#allocation5 + $0xe0] sm:$0xf]
        %v273 = vld [vmem:[#allocation5 + $0xe4] sm:$0xf]
        %v274 = vld [vmem:[#allocation5 + $0xe8] sm:$0xf]
        %v275 = vld [vmem:[#allocation5 + $0xec] sm:$0xf]
        %v276 = vld [vmem:[#allocation5 + $0xf0] sm:$0xf]
        %v277 = vld [vmem:[#allocation5 + $0xf4] sm:$0xf]
        %v278 = vld [vmem:[#allocation5 + $0xf8] sm:$0xf]
        %v279 = vld [vmem:[#allocation5 + $0xfc] sm:$0xf]
        %v312 = vunpack.c.l.b16 %v184
        %v313 = vunpack.c.h.b16 %v184
        %v314 = vunpack.c.l.b16 %v185
        %v315 = vunpack.c.h.b16 %v185
        %v316 = vunpack.c.l.b16 %v186
        %v317 = vunpack.c.h.b16 %v186
        %v318 = vunpack.c.l.b16 %v187
        %v319 = vunpack.c.h.b16 %v187
        %v320 = vunpack.c.l.b16 %v188
        %v321 = vunpack.c.h.b16 %v188
        %v322 = vunpack.c.l.b16 %v189
        %v323 = vunpack.c.h.b16 %v189
        %v324 = vunpack.c.l.b16 %v190
        %v325 = vunpack.c.h.b16 %v190
        %v326 = vunpack.c.l.b16 %v191
        %v327 = vunpack.c.h.b16 %v191
        %v328 = vunpack.c.l.b16 %v192
        %v329 = vunpack.c.h.b16 %v192
        %v330 = vunpack.c.l.b16 %v193
        %v331 = vunpack.c.h.b16 %v193
        %v332 = vunpack.c.l.b16 %v194
        %v333 = vunpack.c.h.b16 %v194
        %v334 = vunpack.c.l.b16 %v195
        %v335 = vunpack.c.h.b16 %v195
        %v336 = vunpack.c.l.b16 %v196
        %v337 = vunpack.c.h.b16 %v196
        %v338 = vunpack.c.l.b16 %v197
        %v339 = vunpack.c.h.b16 %v197
        %v340 = vunpack.c.l.b16 %v198
        %v341 = vunpack.c.h.b16 %v198
        %v342 = vunpack.c.l.b16 %v199
        %v343 = vunpack.c.h.b16 %v199
        %v344 = vunpack.c.l.b16 %v200
        %v345 = vunpack.c.h.b16 %v200
        %v346 = vunpack.c.l.b16 %v201
        %v347 = vunpack.c.h.b16 %v201
        %v348 = vunpack.c.l.b16 %v202
        %v349 = vunpack.c.h.b16 %v202
        %v350 = vunpack.c.l.b16 %v203
        %v351 = vunpack.c.h.b16 %v203
        %v352 = vunpack.c.l.b16 %v204
        %v353 = vunpack.c.h.b16 %v204
        %v354 = vunpack.c.l.b16 %v205
        %v355 = vunpack.c.h.b16 %v205
        %v356 = vunpack.c.l.b16 %v206
        %v357 = vunpack.c.h.b16 %v206
        %v358 = vunpack.c.l.b16 %v207
        %v359 = vunpack.c.h.b16 %v207
        %v360 = vunpack.c.l.b16 %v208
        %v361 = vunpack.c.h.b16 %v208
        %v362 = vunpack.c.l.b16 %v209
        %v363 = vunpack.c.h.b16 %v209
        %v364 = vunpack.c.l.b16 %v210
        %v365 = vunpack.c.h.b16 %v210
        %v366 = vunpack.c.l.b16 %v211
        %v367 = vunpack.c.h.b16 %v211
        %v368 = vunpack.c.l.b16 %v212
        %v369 = vunpack.c.h.b16 %v212
        %v370 = vunpack.c.l.b16 %v213
        %v371 = vunpack.c.h.b16 %v213
        %v372 = vunpack.c.l.b16 %v214
        %v373 = vunpack.c.h.b16 %v214
        %v374 = vunpack.c.l.b16 %v215
        %v375 = vunpack.c.h.b16 %v215
        %v376 = vpack.c.b16 %v316, %v312
        %v377 = vpack.c.b16 %v317, %v313
        %v378 = vpack.c.b16 %v318, %v314
        %v379 = vpack.c.b16 %v319, %v315
        %v380 = vpack.c.b16 %v324, %v320
        %v381 = vpack.c.b16 %v325, %v321
        %v382 = vpack.c.b16 %v326, %v322
        %v383 = vpack.c.b16 %v327, %v323
        %v384 = vpack.c.b16 %v332, %v328
        %v385 = vpack.c.b16 %v333, %v329
        %v386 = vpack.c.b16 %v334, %v330
        %v387 = vpack.c.b16 %v335, %v331
        %v388 = vpack.c.b16 %v340, %v336
        %v389 = vpack.c.b16 %v341, %v337
        %v390 = vpack.c.b16 %v342, %v338
        %v391 = vpack.c.b16 %v343, %v339
        %v392 = vpack.c.b16 %v348, %v344
        %v393 = vpack.c.b16 %v349, %v345
        %v394 = vpack.c.b16 %v350, %v346
        %v395 = vpack.c.b16 %v351, %v347
        %v396 = vpack.c.b16 %v356, %v352
        %v397 = vpack.c.b16 %v357, %v353
        %v398 = vpack.c.b16 %v358, %v354
        %v399 = vpack.c.b16 %v359, %v355
        %v400 = vpack.c.b16 %v364, %v360
        %v401 = vpack.c.b16 %v365, %v361
        %v402 = vpack.c.b16 %v366, %v362
        %v403 = vpack.c.b16 %v367, %v363
        %v404 = vpack.c.b16 %v372, %v368
        %v405 = vpack.c.b16 %v373, %v369
        %v406 = vpack.c.b16 %v374, %v370
        %v407 = vpack.c.b16 %v375, %v371
        %v504 = vunpack.c.l.b16 %v216
        %v505 = vunpack.c.l.b16 %v217
        %v506 = vunpack.c.l.b16 %v218
        %v507 = vunpack.c.l.b16 %v219
        %v508 = vunpack.c.l.b16 %v220
        %v509 = vunpack.c.l.b16 %v221
        %v510 = vunpack.c.l.b16 %v222
        %v511 = vunpack.c.l.b16 %v223
        %v512 = vunpack.c.l.b16 %v224
        %v513 = vunpack.c.l.b16 %v225
        %v514 = vunpack.c.l.b16 %v226
        %v515 = vunpack.c.l.b16 %v227
        %v516 = vunpack.c.l.b16 %v228
        %v517 = vunpack.c.l.b16 %v229
        %v518 = vunpack.c.l.b16 %v230
        %v519 = vunpack.c.l.b16 %v231
        %v520 = vunpack.c.l.b16 %v232
        %v521 = vunpack.c.l.b16 %v233
        %v522 = vunpack.c.l.b16 %v234
        %v523 = vunpack.c.l.b16 %v235
        %v524 = vunpack.c.l.b16 %v236
        %v525 = vunpack.c.l.b16 %v237
        %v526 = vunpack.c.l.b16 %v238
        %v527 = vunpack.c.l.b16 %v239
        %v528 = vunpack.c.l.b16 %v240
        %v529 = vunpack.c.l.b16 %v241
        %v530 = vunpack.c.l.b16 %v242
        %v531 = vunpack.c.l.b16 %v243
        %v532 = vunpack.c.l.b16 %v244
        %v533 = vunpack.c.l.b16 %v245
        %v534 = vunpack.c.l.b16 %v246
        %v535 = vunpack.c.l.b16 %v247
        %v536 = vunpack.c.l.b16 %v248
        %v537 = vunpack.c.l.b16 %v249
        %v538 = vunpack.c.l.b16 %v250
        %v539 = vunpack.c.l.b16 %v251
        %v540 = vunpack.c.l.b16 %v252
        %v541 = vunpack.c.l.b16 %v253
        %v542 = vunpack.c.l.b16 %v254
        %v543 = vunpack.c.l.b16 %v255
        %v544 = vunpack.c.l.b16 %v256
        %v545 = vunpack.c.l.b16 %v257
        %v546 = vunpack.c.l.b16 %v258
        %v547 = vunpack.c.l.b16 %v259
        %v548 = vunpack.c.l.b16 %v260
        %v549 = vunpack.c.l.b16 %v261
        %v550 = vunpack.c.l.b16 %v262
        %v551 = vunpack.c.l.b16 %v263
        %v552 = vunpack.c.l.b16 %v264
        %v553 = vunpack.c.l.b16 %v265
        %v554 = vunpack.c.l.b16 %v266
        %v555 = vunpack.c.l.b16 %v267
        %v556 = vunpack.c.l.b16 %v268
        %v557 = vunpack.c.l.b16 %v269
        %v558 = vunpack.c.l.b16 %v270
        %v559 = vunpack.c.l.b16 %v271
        %v560 = vunpack.c.l.b16 %v272
        %v561 = vunpack.c.l.b16 %v273
        %v562 = vunpack.c.l.b16 %v274
        %v563 = vunpack.c.l.b16 %v275
        %v564 = vunpack.c.l.b16 %v276
        %v565 = vunpack.c.l.b16 %v277
        %v566 = vunpack.c.l.b16 %v278
        %v567 = vunpack.c.l.b16 %v279
        %v568 = vpack.c.b16 %v505, %v504
        %v569 = vpack.c.b16 %v507, %v506
        %v570 = vpack.c.b16 %v509, %v508
        %v571 = vpack.c.b16 %v511, %v510
        %v572 = vpack.c.b16 %v513, %v512
        %v573 = vpack.c.b16 %v515, %v514
        %v574 = vpack.c.b16 %v517, %v516
        %v575 = vpack.c.b16 %v519, %v518
        %v576 = vpack.c.b16 %v521, %v520
        %v577 = vpack.c.b16 %v523, %v522
        %v578 = vpack.c.b16 %v525, %v524
        %v579 = vpack.c.b16 %v527, %v526
        %v580 = vpack.c.b16 %v529, %v528
        %v581 = vpack.c.b16 %v531, %v530
        %v582 = vpack.c.b16 %v533, %v532
        %v583 = vpack.c.b16 %v535, %v534
        %v584 = vpack.c.b16 %v537, %v536
        %v585 = vpack.c.b16 %v539, %v538
        %v586 = vpack.c.b16 %v541, %v540
        %v587 = vpack.c.b16 %v543, %v542
        %v588 = vpack.c.b16 %v545, %v544
        %v589 = vpack.c.b16 %v547, %v546
        %v590 = vpack.c.b16 %v549, %v548
        %v591 = vpack.c.b16 %v551, %v550
        %v592 = vpack.c.b16 %v553, %v552
        %v593 = vpack.c.b16 %v555, %v554
        %v594 = vpack.c.b16 %v557, %v556
        %v595 = vpack.c.b16 %v559, %v558
        %v596 = vpack.c.b16 %v561, %v560
        %v597 = vpack.c.b16 %v563, %v562
        %v598 = vpack.c.b16 %v565, %v564
        %v599 = vpack.c.b16 %v567, %v566
        %632 = vmatpush.bf16.msra.mxu0 %v575
        %633 = vmatpush.bf16.msra.mxu0 %v574
        %634 = vmatpush.bf16.msra.mxu0 %v573
        %635 = vmatpush.bf16.msra.mxu0 %v572
        %636 = vmatpush.bf16.msra.mxu0 %v571
        %637 = vmatpush.bf16.msra.mxu0 %v570
        %638 = vmatpush.bf16.msra.mxu0 %v569
        %639 = vmatpush.bf16.msra.mxu0 %v568
        %640 = vmatmul.bf16.gmra.mxu0 %v376
        %v641 = vpop.f32.mrf.mxu0
        %v642 = vadd.f32 0.0, %v641
        %v643 = vpop.f32.mrf.mxu0
        %v644 = vadd.f32 0.0, %v643
        %645 = vmatmul.bf16.gmra.mxu0 %v380
        %v646 = vpop.f32.mrf.mxu0
        %v647 = vadd.f32 0.0, %v646
        %v648 = vpop.f32.mrf.mxu0
        %v649 = vadd.f32 0.0, %v648
        %650 = vmatmul.bf16.gmra.mxu0 %v384
        %v651 = vpop.f32.mrf.mxu0
        %v652 = vadd.f32 0.0, %v651
        %v653 = vpop.f32.mrf.mxu0
        %v654 = vadd.f32 0.0, %v653
        %655 = vmatmul.bf16.gmra.mxu0 %v388
        %v656 = vpop.f32.mrf.mxu0
        %v657 = vadd.f32 0.0, %v656
        %v658 = vpop.f32.mrf.mxu0
        %v659 = vadd.f32 0.0, %v658
        %660 = vmatmul.bf16.gmra.mxu0 %v392
        %v661 = vpop.f32.mrf.mxu0
        %v662 = vadd.f32 0.0, %v661
        %v663 = vpop.f32.mrf.mxu0
        %v664 = vadd.f32 0.0, %v663
        %665 = vmatmul.bf16.gmra.mxu0 %v396
        %v666 = vpop.f32.mrf.mxu0
        %v667 = vadd.f32 0.0, %v666
        %v668 = vpop.f32.mrf.mxu0
        %v669 = vadd.f32 0.0, %v668
        %670 = vmatmul.bf16.gmra.mxu0 %v400
        %v671 = vpop.f32.mrf.mxu0
        %v672 = vadd.f32 0.0, %v671
        %v673 = vpop.f32.mrf.mxu0
        %v674 = vadd.f32 0.0, %v673
        %675 = vmatmul.bf16.gmra.mxu0 %v404
        %v676 = vpop.f32.mrf.mxu0
        %v677 = vadd.f32 0.0, %v676
        %v678 = vpop.f32.mrf.mxu0
        %v679 = vadd.f32 0.0, %v678
        %680 = vdwg.mxu0
        %681 = vmatpush.bf16.msra.mxu0 %v583
        %682 = vmatpush.bf16.msra.mxu0 %v582
        %683 = vmatpush.bf16.msra.mxu0 %v581
        %684 = vmatpush.bf16.msra.mxu0 %v580
        %685 = vmatpush.bf16.msra.mxu0 %v579
        %686 = vmatpush.bf16.msra.mxu0 %v578
        %687 = vmatpush.bf16.msra.mxu0 %v577
        %688 = vmatpush.bf16.msra.mxu0 %v576
        %689 = vmatmul.bf16.gmra.mxu0 %v377
        %v690 = vpop.f32.mrf.mxu0
        %v691 = vadd.f32 %v642, %v690
        %v692 = vpop.f32.mrf.mxu0
        %v693 = vadd.f32 %v644, %v692
        %694 = vmatmul.bf16.gmra.mxu0 %v381
        %v695 = vpop.f32.mrf.mxu0
        %v696 = vadd.f32 %v647, %v695
        %v697 = vpop.f32.mrf.mxu0
        %v698 = vadd.f32 %v649, %v697
        %699 = vmatmul.bf16.gmra.mxu0 %v385
        %v700 = vpop.f32.mrf.mxu0
        %v701 = vadd.f32 %v652, %v700
        %v702 = vpop.f32.mrf.mxu0
        %v703 = vadd.f32 %v654, %v702
        %704 = vmatmul.bf16.gmra.mxu0 %v389
        %v705 = vpop.f32.mrf.mxu0
        %v706 = vadd.f32 %v657, %v705
        %v707 = vpop.f32.mrf.mxu0
        %v708 = vadd.f32 %v659, %v707
        %709 = vmatmul.bf16.gmra.mxu0 %v393
        %v710 = vpop.f32.mrf.mxu0
        %v711 = vadd.f32 %v662, %v710
        %v712 = vpop.f32.mrf.mxu0
        %v713 = vadd.f32 %v664, %v712
        %714 = vmatmul.bf16.gmra.mxu0 %v397
        %v715 = vpop.f32.mrf.mxu0
        %v716 = vadd.f32 %v667, %v715
        %v717 = vpop.f32.mrf.mxu0
        %v718 = vadd.f32 %v669, %v717
        %719 = vmatmul.bf16.gmra.mxu0 %v401
        %v720 = vpop.f32.mrf.mxu0
        %v721 = vadd.f32 %v672, %v720
        %v722 = vpop.f32.mrf.mxu0
        %v723 = vadd.f32 %v674, %v722
        %724 = vmatmul.bf16.gmra.mxu0 %v405
        %v725 = vpop.f32.mrf.mxu0
        %v726 = vadd.f32 %v677, %v725
        %v727 = vpop.f32.mrf.mxu0
        %v728 = vadd.f32 %v679, %v727
        %729 = vdwg.mxu0
        %730 = vmatpush.bf16.msra.mxu0 %v591
        %731 = vmatpush.bf16.msra.mxu0 %v590
        %732 = vmatpush.bf16.msra.mxu0 %v589
        %733 = vmatpush.bf16.msra.mxu0 %v588
        %734 = vmatpush.bf16.msra.mxu0 %v587
        %735 = vmatpush.bf16.msra.mxu0 %v586
        %736 = vmatpush.bf16.msra.mxu0 %v585
        %737 = vmatpush.bf16.msra.mxu0 %v584
        %738 = vmatmul.bf16.gmra.mxu0 %v378
        %v739 = vpop.f32.mrf.mxu0
        %v740 = vadd.f32 %v691, %v739
        %v741 = vpop.f32.mrf.mxu0
        %v742 = vadd.f32 %v693, %v741
        %743 = vmatmul.bf16.gmra.mxu0 %v382
        %v744 = vpop.f32.mrf.mxu0
        %v745 = vadd.f32 %v696, %v744
        %v746 = vpop.f32.mrf.mxu0
        %v747 = vadd.f32 %v698, %v746
        %748 = vmatmul.bf16.gmra.mxu0 %v386
        %v749 = vpop.f32.mrf.mxu0
        %v750 = vadd.f32 %v701, %v749
        %v751 = vpop.f32.mrf.mxu0
        %v752 = vadd.f32 %v703, %v751
        %753 = vmatmul.bf16.gmra.mxu0 %v390
        %v754 = vpop.f32.mrf.mxu0
        %v755 = vadd.f32 %v706, %v754
        %v756 = vpop.f32.mrf.mxu0
        %v757 = vadd.f32 %v708, %v756
        %758 = vmatmul.bf16.gmra.mxu0 %v394
        %v759 = vpop.f32.mrf.mxu0
        %v760 = vadd.f32 %v711, %v759
        %v761 = vpop.f32.mrf.mxu0
        %v762 = vadd.f32 %v713, %v761
        %763 = vmatmul.bf16.gmra.mxu0 %v398
        %v764 = vpop.f32.mrf.mxu0
        %v765 = vadd.f32 %v716, %v764
        %v766 = vpop.f32.mrf.mxu0
        %v767 = vadd.f32 %v718, %v766
        %768 = vmatmul.bf16.gmra.mxu0 %v402
        %v769 = vpop.f32.mrf.mxu0
        %v770 = vadd.f32 %v721, %v769
        %v771 = vpop.f32.mrf.mxu0
        %v772 = vadd.f32 %v723, %v771
        %773 = vmatmul.bf16.gmra.mxu0 %v406
        %v774 = vpop.f32.mrf.mxu0
        %v775 = vadd.f32 %v726, %v774
        %v776 = vpop.f32.mrf.mxu0
        %v777 = vadd.f32 %v728, %v776
        %778 = vdwg.mxu0
        %779 = vmatpush.bf16.msra.mxu0 %v599
        %780 = vmatpush.bf16.msra.mxu0 %v598
        %781 = vmatpush.bf16.msra.mxu0 %v597
        %782 = vmatpush.bf16.msra.mxu0 %v596
        %783 = vmatpush.bf16.msra.mxu0 %v595
        %784 = vmatpush.bf16.msra.mxu0 %v594
        %785 = vmatpush.bf16.msra.mxu0 %v593
        %786 = vmatpush.bf16.msra.mxu0 %v592
        %787 = vmatmul.bf16.gmra.mxu0 %v379
        %v788 = vpop.f32.mrf.mxu0
        %v789 = vadd.f32 %v740, %v788
        %v790 = vpop.f32.mrf.mxu0
        %v791 = vadd.f32 %v742, %v790
        %792 = vmatmul.bf16.gmra.mxu0 %v383
        %v793 = vpop.f32.mrf.mxu0
        %v794 = vadd.f32 %v745, %v793
        %v795 = vpop.f32.mrf.mxu0
        %v796 = vadd.f32 %v747, %v795
        %797 = vmatmul.bf16.gmra.mxu0 %v387
        %v798 = vpop.f32.mrf.mxu0
        %v799 = vadd.f32 %v750, %v798
        %v800 = vpop.f32.mrf.mxu0
        %v801 = vadd.f32 %v752, %v800
        %802 = vmatmul.bf16.gmra.mxu0 %v391
        %v803 = vpop.f32.mrf.mxu0
        %v804 = vadd.f32 %v755, %v803
        %v805 = vpop.f32.mrf.mxu0
        %v806 = vadd.f32 %v757, %v805
        %807 = vmatmul.bf16.gmra.mxu0 %v395
        %v808 = vpop.f32.mrf.mxu0
        %v809 = vadd.f32 %v760, %v808
        %v810 = vpop.f32.mrf.mxu0
        %v811 = vadd.f32 %v762, %v810
        %812 = vmatmul.bf16.gmra.mxu0 %v399
        %v813 = vpop.f32.mrf.mxu0
        %v814 = vadd.f32 %v765, %v813
        %v815 = vpop.f32.mrf.mxu0
        %v816 = vadd.f32 %v767, %v815
        %817 = vmatmul.bf16.gmra.mxu0 %v403
        %v818 = vpop.f32.mrf.mxu0
        %v819 = vadd.f32 %v770, %v818
        %v820 = vpop.f32.mrf.mxu0
        %v821 = vadd.f32 %v772, %v820
        %822 = vmatmul.bf16.gmra.mxu0 %v407
        %v823 = vpop.f32.mrf.mxu0
        %v824 = vadd.f32 %v775, %v823
        %v825 = vpop.f32.mrf.mxu0
        %v826 = vadd.f32 %v777, %v825
        %827 = vdwg.mxu0
        %v828 = vpack.c.bf16 %v789, %v789
        %v829 = vpack.c.bf16 %v791, %v791
        %v830 = vpack.c.bf16 %v794, %v794
        %v831 = vpack.c.bf16 %v796, %v796
        %v832 = vpack.c.bf16 %v799, %v799
        %v833 = vpack.c.bf16 %v801, %v801
        %v834 = vpack.c.bf16 %v804, %v804
        %v835 = vpack.c.bf16 %v806, %v806
        %v836 = vpack.c.bf16 %v809, %v809
        %v837 = vpack.c.bf16 %v811, %v811
        %v838 = vpack.c.bf16 %v814, %v814
        %v839 = vpack.c.bf16 %v816, %v816
        %v840 = vpack.c.bf16 %v819, %v819
        %v841 = vpack.c.bf16 %v821, %v821
        %v842 = vpack.c.bf16 %v824, %v824
        %v843 = vpack.c.bf16 %v826, %v826
        %844 = vst [vmem:[%s181] sm:$0xf] %v828
        %845 = vst [vmem:[%s181 + $0x4] sm:$0xf] %v829
        %846 = vst [vmem:[%s181 + $0x8] sm:$0xf] %v830
        %847 = vst [vmem:[%s181 + $0xc] sm:$0xf] %v831
        %848 = vst [vmem:[%s181 + $0x10] sm:$0xf] %v832
        %849 = vst [vmem:[%s181 + $0x14] sm:$0xf] %v833
        %850 = vst [vmem:[%s181 + $0x18] sm:$0xf] %v834
        %851 = vst [vmem:[%s181 + $0x1c] sm:$0xf] %v835
        %852 = vst [vmem:[%s181 + $0x20] sm:$0xf] %v836
        %853 = vst [vmem:[%s181 + $0x24] sm:$0xf] %v837
        %854 = vst [vmem:[%s181 + $0x28] sm:$0xf] %v838
        %855 = vst [vmem:[%s181 + $0x2c] sm:$0xf] %v839
        %856 = vst [vmem:[%s181 + $0x30] sm:$0xf] %v840
        %857 = vst [vmem:[%s181 + $0x34] sm:$0xf] %v841
        %858 = vst [vmem:[%s181 + $0x38] sm:$0xf] %v842
        %859 = vst [vmem:[%s181 + $0x3c] sm:$0xf] %v843
        %s860 = sand.u32 %s75, 1
        %s861 = scalar_lea.sflag [#allocation4], %s860
        %s862 = sand.u32 %s75, 1
        %s863 = smul.addr %s862, 64
        %s864 = scalar_lea.vmem [#allocation7], %s863
        // Predicated region
        $region37: #{tpu_custom_call.1} parent=27 // pred_check
          %p865 = pneg %p85
        $region38: #{tpu_custom_call.1} parent=27 // pred_check_branch
          %867 = sbr.rel (%p865) target = $region40
        $region39: #{tpu_custom_call.1} parent=27 // pred_region
          %s868 = smul.u32 16, %s20
          %870 = vsyncadd %s861, 0
          %s871 = smul.addr %s868, 4
          %s872 = scalar_lea.hbm %s2, %s871
          %s873 = sshll.u32 %s864, 4
          %s874 = int_to_ptr.vmem [resolvable:$true] %s873
          %s875 = sshll.u32 %s872, 4
          %s876 = int_to_ptr.hbm [resolvable:$true] %s875
          %881 = dma.vmem_to_hbm [thread:$0]  %s874, 1024, %s876, %s861, 64, 64, 4
        $region40: #{tpu_custom_call.1} parent=27 // pred_fallthru
          _
      $region28: #{tpu_custom_call.1} parent=5 // pred_fallthru
        _
      %p882 = scmp.le.s32.totalorder 2, %s15
      // Predicated region
      $region41: #{tpu_custom_call.1} parent=5 // pred_check
        %p883 = pneg %p882
      $region42: #{tpu_custom_call.1} parent=5 // pred_check_branch
        %885 = sbr.rel (%p883) target = $region44
      $region43: #{tpu_custom_call.1} parent=5 // pred_region
        %s886 = ssub.s32 %s15, 2
        // Predicated region
        $region45: #{tpu_custom_call.1} parent=43 // pred_check
          %p887 = pneg %p91
        $region46: #{tpu_custom_call.1} parent=43 // pred_check_branch
          %889 = sbr.rel (%p887) target = $region48
        $region47: #{tpu_custom_call.1} parent=43 // pred_region
          %s890 = sand.u32 %s76, 1
          %s891 = scalar_lea.sflag [#allocation4], %s890
          %s892 = sand.u32 %s76, 1
          %s893 = smul.addr %s892, 64
          %s894 = scalar_lea.vmem [#allocation7], %s893
          %896 = dma.done %s891, 1024
        $region48: #{tpu_custom_call.1} parent=43 // pred_fallthru
          _
      $region44: #{tpu_custom_call.1} parent=5 // pred_fallthru
        _
    $region6: #{tpu_custom_call.1} parent=1 // loop_footer
      %s19 = sadd.s32 1, %s15
    $region7: #{tpu_custom_call.1} parent=1 // loop_footer_branch
      %14 = sbr.rel target = $region3
    $region8: #{tpu_custom_call.1} parent=1 // loop_exit
      _
    %897 = vsyncpa [#allocation3], 1
    %s898 = scalar_lea.sflag [#allocation3], 1
    %899 = vsyncpa %s898, 1
    %900 = vsyncpa [#allocation6], 1
    %901 = vsyncpa [#allocation4], 1
    %s902 = scalar_lea.sflag [#allocation4], 1
    %903 = vsyncpa %s902, 1

</llo_original>
